<compile_context>
chip_gen: v7x
topology: tpu7x:2x2x1
jax: 0.10.0
libtpu: 0.0.40
codegen_flags: <defaults>
</compile_context>

<pallas_src>
import functools

import jax
import jax.numpy as jnp
from jax.experimental import pallas as pl
from jax.experimental.pallas import tpu as pltpu


def policy_net_kernel(x_ref, w1_ref, b1_ref, w2_ref, b2_ref, out_ref):
    # Two MXU matmuls (bf16 in, f32 acc) + f32 ReLU + f32 numerically-stable softmax.
    x = x_ref[...]                                                     # (tb, S) bf16
    h = jnp.dot(x, w1_ref[...], preferred_element_type=jnp.float32)    # (tb, H) f32
    h = jnp.maximum(h + b1_ref[...], 0.0)                              # bias + ReLU in f32
    logits = jnp.dot(h.astype(jnp.bfloat16), w2_ref[...],
                     preferred_element_type=jnp.float32)               # (tb, A_pad) f32
    logits = logits + b2_ref[...]                                      # padded cols -> -1e30
    m = jnp.max(logits, axis=-1, keepdims=True)                        # softmax(dim=-1)
    e = jnp.exp(logits - m)                                            # padded cols -> 0.0
    denom = jnp.sum(e, axis=-1, keepdims=True)
    out_ref[...] = (e * pl.reciprocal(denom, approx=False)).astype(out_ref.dtype)


@functools.partial(jax.jit, static_argnames=("block_b",))
def policy_net_forward(x, w1, b1, w2, b2, *, block_b=256):
    """x: (B, state_dim) f32. Returns softmax action distribution (B, action_dim) f32."""
    B, S = x.shape
    H = w1.shape[1]
    A = w2.shape[1]

    # ---- lane-dense output: pad action dim to a multiple of 128 -------------
    A_pad = max(128, ((A + 127) // 128) * 128)
    if A_pad != A:
        w2_p = jnp.pad(w2, ((0, 0), (0, A_pad - A)))                       # zero columns
        b2_p = jnp.concatenate(
            [b2, jnp.full((1, A_pad - A), -1e30, dtype=b2.dtype)], axis=1)  # finite -inf-ish
    else:
        w2_p, b2_p = w2, b2

    # ---- batch tiling: pad B to a multiple of the row tile -------------------
    tb = min(block_b, max(8, B))
    tb = ((tb + 7) // 8) * 8                    # sublane-aligned row tile
    B_pad = ((B + tb - 1) // tb) * tb
    x_p = jnp.pad(x, ((0, B_pad - B), (0, 0))) if B_pad != B else x

    # ---- bf16 MXU operands (halves x DMA bytes per grid step) ---------------
    x_bf = x_p.astype(jnp.bfloat16)
    w1_bf = w1.astype(jnp.bfloat16)
    w2_bf = w2_p.astype(jnp.bfloat16)

    grid = (B_pad // tb,)
    out = pl.pallas_call(
        policy_net_kernel,
        out_shape=jax.ShapeDtypeStruct((B_pad, A_pad), jnp.float32),
        grid_spec=pltpu.PrefetchScalarGridSpec(
            num_scalar_prefetch=0,
            grid=grid,
            in_specs=[
                pl.BlockSpec((tb, S), lambda i: (i, 0)),      # x: streamed over batch
                pl.BlockSpec((S, H), lambda i: (0, 0)),       # w1: VMEM-resident
                pl.BlockSpec((1, H), lambda i: (0, 0)),       # b1: VMEM-resident
                pl.BlockSpec((H, A_pad), lambda i: (0, 0)),   # w2: VMEM-resident
                pl.BlockSpec((1, A_pad), lambda i: (0, 0)),   # b2: VMEM-resident
            ],
            out_specs=pl.BlockSpec((tb, A_pad), lambda i: (i, 0)),
        ),
        compiler_params=pltpu.CompilerParams(
            dimension_semantics=("parallel",),   # shard batch tiles across TCs on v7x
        ),
    )(x_bf, w1_bf, b1, w2_bf, b2_p)

    return out[:B, :A]


def init_params(key, state_dim, action_dim, hidden=64):
    """Deterministic init mimicking PyTorch nn.Linear (uniform +/- 1/sqrt(fan_in))."""
    k1, k2, k3, k4 = jax.random.split(key, 4)
    bound1 = 1.0 / (state_dim ** 0.5)
    bound2 = 1.0 / (hidden ** 0.5)
    # Stored as (in, out) == W.T relative to PyTorch's (out, in).
    w1 = jax.random.uniform(k1, (state_dim, hidden), jnp.float32, -bound1, bound1)
    b1 = jax.random.uniform(k2, (1, hidden), jnp.float32, -bound1, bound1)
    w2 = jax.random.uniform(k3, (hidden, action_dim), jnp.float32, -bound2, bound2)
    b2 = jax.random.uniform(k4, (1, action_dim), jnp.float32, -bound2, bound2)
    return w1, b1, w2, b2


def reference_forward_bf16(x, w1, b1, w2, b2):
    """Reference with the same bf16-matmul / f32-accumulate recipe as the kernel."""
    h = jnp.dot(x.astype(jnp.bfloat16), w1.astype(jnp.bfloat16),
                preferred_element_type=jnp.float32) + b1
    h = jnp.maximum(h, 0.0)
    logits = jnp.dot(h.astype(jnp.bfloat16), w2.astype(jnp.bfloat16),
                     preferred_element_type=jnp.float32) + b2
    return jax.nn.softmax(logits, axis=-1)


def reference_forward_f32(x, w1, b1, w2, b2):
    """Pure-f32 reference matching the original PyTorch module semantics."""
    h = jnp.maximum(x @ w1 + b1, 0.0)
    logits = h @ w2 + b2
    return jax.nn.softmax(logits, axis=-1)


if __name__ == "__main__":
    key = jax.random.PRNGKey(0)
    kx, kp, kx2 = jax.random.split(key, 3)

    state_dim = 32
    action_dim = 8
    w1, b1, w2, b2 = init_params(kp, state_dim, action_dim)

    # --- small RL-style batch (single grid step) ------------------------------
    batch = 8
    x = jax.random.normal(kx, (batch, state_dim), dtype=jnp.float32)
    dist = jax.block_until_ready(policy_net_forward(x, w1, b1, w2, b2))

    ref_bf = reference_forward_bf16(x, w1, b1, w2, b2)
    ref_f32 = reference_forward_f32(x, w1, b1, w2, b2)
    assert dist.shape == (batch, action_dim)
    assert jnp.allclose(dist, ref_bf, atol=1e-5, rtol=1e-5)
    assert jnp.allclose(dist, ref_f32, atol=2e-2, rtol=2e-2)      # bf16 MXU rounding
    assert jnp.allclose(jnp.sum(dist, axis=-1), 1.0, atol=1e-5)

    # --- larger, non-tile-multiple batch (multi-step pipelined grid + padding) -
    batch2 = 200
    x2 = jax.random.normal(kx2, (batch2, state_dim), dtype=jnp.float32)
    dist2 = jax.block_until_ready(policy_net_forward(x2, w1, b1, w2, b2, block_b=64))

    ref2_bf = reference_forward_bf16(x2, w1, b1, w2, b2)
    assert dist2.shape == (batch2, action_dim)
    assert jnp.allclose(dist2, ref2_bf, atol=1e-5, rtol=1e-5)
    assert jnp.allclose(jnp.sum(dist2, axis=-1), 1.0, atol=1e-5)

    print("KERNEL_OK")
</pallas_src>

<mosaic_0001>
module attributes {stable_mosaic.version = 11 : i64} {
  func.func @policy_net_kernel(%arg0: i32, %arg1: memref<8x32xbf16, #tpu.memory_space<vmem>>, %arg2: memref<32x64xbf16, #tpu.memory_space<vmem>>, %arg3: memref<1x64xf32, #tpu.memory_space<vmem>>, %arg4: memref<64x128xbf16, #tpu.memory_space<vmem>>, %arg5: memref<1x128xf32, #tpu.memory_space<vmem>>, %arg6: memref<8x128xf32, #tpu.memory_space<vmem>>) attributes {dimension_semantics = [#tpu.dimension_semantics<parallel>], iteration_bounds = array<i64: 1>, scalar_prefetch = 0 : i64, scratch_operands = 0 : i64, tpu.core_type = #tpu.core_type<tc>, window_params = [{transform_indices = @transform_0, window_bounds = array<i64: 8, 32>}, {pipeline_mode = #tpu.pipeline_mode<synchronous>, transform_indices = @transform_1, window_bounds = array<i64: 32, 64>}, {pipeline_mode = #tpu.pipeline_mode<synchronous>, transform_indices = @transform_2, window_bounds = array<i64: 1, 64>}, {pipeline_mode = #tpu.pipeline_mode<synchronous>, transform_indices = @transform_3, window_bounds = array<i64: 64, 128>}, {pipeline_mode = #tpu.pipeline_mode<synchronous>, transform_indices = @transform_4, window_bounds = array<i64: 1, 128>}, {transform_indices = @transform_5, window_bounds = array<i64: 8, 128>}]} {
    %c0 = arith.constant 0 : index
    %c0_0 = arith.constant 0 : index
    %0 = vector.load %arg1[%c0, %c0_0] : memref<8x32xbf16, #tpu.memory_space<vmem>>, vector<8x32xbf16>
    %c0_1 = arith.constant 0 : index
    %c0_2 = arith.constant 0 : index
    %1 = vector.load %arg2[%c0_1, %c0_2] : memref<32x64xbf16, #tpu.memory_space<vmem>>, vector<32x64xbf16>
    %cst = arith.constant dense<0.000000e+00> : vector<8x64xf32>
    %2 = tpu.matmul %0, %1, %cst {dimension_numbers = #tpu.dot_dimension_numbers<[1], [0], [0], [1], [0, 0, 1, 1], [], []>} : vector<8x32xbf16>, vector<32x64xbf16>, vector<8x64xf32> -> vector<8x64xf32>
    %c0_3 = arith.constant 0 : index
    %c0_4 = arith.constant 0 : index
    %3 = vector.load %arg3[%c0_3, %c0_4] : memref<1x64xf32, #tpu.memory_space<vmem>>, vector<1x64xf32>
    %4 = vector.broadcast %3 : vector<1x64xf32> to vector<8x64xf32>
    %5 = arith.addf %2, %4 : vector<8x64xf32>
    %cst_5 = arith.constant 0.000000e+00 : f32
    %6 = vector.broadcast %cst_5 : f32 to vector<8x64xf32>
    %7 = arith.maximumf %5, %6 : vector<8x64xf32>
    %8 = arith.truncf %7 : vector<8x64xf32> to vector<8x64xbf16>
    %c0_6 = arith.constant 0 : index
    %c0_7 = arith.constant 0 : index
    %9 = vector.load %arg4[%c0_6, %c0_7] : memref<64x128xbf16, #tpu.memory_space<vmem>>, vector<64x128xbf16>
    %cst_8 = arith.constant dense<0.000000e+00> : vector<8x128xf32>
    %10 = tpu.matmul %8, %9, %cst_8 {dimension_numbers = #tpu.dot_dimension_numbers<[1], [0], [0], [1], [0, 0, 1, 1], [], []>} : vector<8x64xbf16>, vector<64x128xbf16>, vector<8x128xf32> -> vector<8x128xf32>
    %c0_9 = arith.constant 0 : index
    %c0_10 = arith.constant 0 : index
    %11 = vector.load %arg5[%c0_9, %c0_10] : memref<1x128xf32, #tpu.memory_space<vmem>>, vector<1x128xf32>
    %12 = vector.broadcast %11 : vector<1x128xf32> to vector<8x128xf32>
    %13 = arith.addf %10, %12 : vector<8x128xf32>
    %cst_11 = arith.constant dense<0xFF800000> : vector<8xf32>
    %14 = vector.multi_reduction <maximumf>, %13, %cst_11 [1] : vector<8x128xf32> to vector<8xf32>
    %15 = vector.shape_cast %14 : vector<8xf32> to vector<8x1xf32>
    %16 = vector.broadcast %15 : vector<8x1xf32> to vector<8x128xf32>
    %17 = arith.subf %13, %16 : vector<8x128xf32>
    %18 = math.exp %17 : vector<8x128xf32>
    %cst_12 = arith.constant dense<0.000000e+00> : vector<8xf32>
    %19 = vector.multi_reduction <add>, %18, %cst_12 [1] : vector<8x128xf32> to vector<8xf32>
    %20 = vector.shape_cast %19 : vector<8xf32> to vector<8x1xf32>
    %21 = tpu.reciprocal %20 : vector<8x1xf32> -> vector<8x1xf32>
    %22 = vector.broadcast %21 : vector<8x1xf32> to vector<8x128xf32>
    %23 = arith.mulf %18, %22 : vector<8x128xf32>
    %c0_13 = arith.constant 0 : index
    %c0_14 = arith.constant 0 : index
    %24 = vector.load %arg6[%c0_13, %c0_14] : memref<8x128xf32, #tpu.memory_space<vmem>>, vector<8x128xf32>
    tpu.vector_store %arg6[%c0_13, %c0_14], %23 {strides = array<i32>} : memref<8x128xf32, #tpu.memory_space<vmem>>, vector<8x128xf32>,
    return
  }
  func.func @transform_0(%arg0: i32) -> (i32, i32) {
    %c0_i32 = arith.constant 0 : i32
    %c0_i32_0 = arith.constant 0 : i32
    return %arg0, %c0_i32 : i32, i32
  }
  func.func @transform_1(%arg0: i32) -> (i32, i32) {
    %c0_i32 = arith.constant 0 : i32
    %c0_i32_0 = arith.constant 0 : i32
    %c0_i32_1 = arith.constant 0 : i32
    return %c0_i32, %c0_i32_0 : i32, i32
  }
  func.func @transform_2(%arg0: i32) -> (i32, i32) {
    %c0_i32 = arith.constant 0 : i32
    %c0_i32_0 = arith.constant 0 : i32
    %c0_i32_1 = arith.constant 0 : i32
    return %c0_i32, %c0_i32_0 : i32, i32
  }
  func.func @transform_3(%arg0: i32) -> (i32, i32) {
    %c0_i32 = arith.constant 0 : i32
    %c0_i32_0 = arith.constant 0 : i32
    %c0_i32_1 = arith.constant 0 : i32
    return %c0_i32, %c0_i32_0 : i32, i32
  }
  func.func @transform_4(%arg0: i32) -> (i32, i32) {
    %c0_i32 = arith.constant 0 : i32
    %c0_i32_0 = arith.constant 0 : i32
    %c0_i32_1 = arith.constant 0 : i32
    return %c0_i32, %c0_i32_0 : i32, i32
  }
  func.func @transform_5(%arg0: i32) -> (i32, i32) {
    %c0_i32 = arith.constant 0 : i32
    %c0_i32_0 = arith.constant 0 : i32
    return %arg0, %c0_i32 : i32, i32
  }
}

</mosaic_0001>

<llo_original>
// kernel: policy_net_forward.1
$region0: #{policy_net_forward.1}
  #allocation0 [shape = 'u32[]', space=smem, size = 0x4, offset = 0x4, fixed_abs, tag = 'smem constant byte address 0x4 - core index']
  #allocation1 [shape = 'u32[144,128]{1,0:T(1,128)}', space=vmem, size = 0x12000, scoped, tag = 'internal scratch']
  %s0 = inlined_call_operand.vmem [shape: bf16[8,32], index: 0, kind: input, shape index: {}]
  %s1 = inlined_call_operand.vmem [shape: bf16[32,64], index: 1, kind: input, shape index: {}]
  %s2 = inlined_call_operand.vmem [shape: f32[1,64], index: 2, kind: input, shape index: {}]
  %s3 = inlined_call_operand.vmem [shape: bf16[64,128], index: 3, kind: input, shape index: {}]
  %s4 = inlined_call_operand.vmem [shape: f32[1,128], index: 4, kind: input, shape index: {}]
  %s5 = inlined_call_operand.hbm [shape: f32[8,128], index: 5, kind: output, shape index: {}]
  %s6 = sld [smem:[#allocation0]]
  $region30: #{policy_net_forward.1} parent=0
    _
  %s8 = ssub.s32 1, %s6
  %s9 = scalar_select 0, %s8, %s6
  $region1: #{policy_net_forward.1} parent=0
    #allocation2 [shape = 'u8[4096]{0}', space=vmem, size = 0x1000, scoped, tag = 'output window, operand 0, single buffered']
    #allocation3 [shape = 's32[1]{0}', space=sflag, size = 0x4, scoped, tag = 'scoped memory for policy_net_forward.1']
    %10 = vsyncpa [#allocation3], 0
    // Predicated region
    $region2: #{policy_net_forward.1} parent=1 // pred_check
      _
    $region3: #{policy_net_forward.1} parent=1 // pred_check_branch
      %12 = sbr.rel (0) target = $region5
    $region4: #{policy_net_forward.1} parent=1 // pred_region
      _
    $region5: #{policy_net_forward.1} parent=1 // pred_fallthru
      _
    // Predicated region
    $region6: #{policy_net_forward.1} parent=1 // pred_check
      _
    $region7: #{policy_net_forward.1} parent=1 // pred_check_branch
      %14 = sbr.rel (0) target = $region9
    $region8: #{policy_net_forward.1} parent=1 // pred_region
      _
    $region9: #{policy_net_forward.1} parent=1 // pred_fallthru
      _
    // Predicated region
    $region10: #{policy_net_forward.1} parent=1 // pred_check
      _
    $region11: #{policy_net_forward.1} parent=1 // pred_check_branch
      %16 = sbr.rel (0) target = $region13
    $region12: #{policy_net_forward.1} parent=1 // pred_region
      _
    $region13: #{policy_net_forward.1} parent=1 // pred_fallthru
      _
    // Predicated region
    $region14: #{policy_net_forward.1} parent=1 // pred_check
      _
    $region15: #{policy_net_forward.1} parent=1 // pred_check_branch
      %18 = sbr.rel (0) target = $region17
    $region16: #{policy_net_forward.1} parent=1 // pred_region
      _
    $region17: #{policy_net_forward.1} parent=1 // pred_fallthru
      _
    // Predicated region
    $region18: #{policy_net_forward.1} parent=1 // pred_check
      _
    $region19: #{policy_net_forward.1} parent=1 // pred_check_branch
      %20 = sbr.rel (0) target = $region21
    $region20: #{policy_net_forward.1} parent=1 // pred_region
      _
    $region21: #{policy_net_forward.1} parent=1 // pred_fallthru
      _
    %v22 = vld [vmem:[%s0] sm:$0xf]
    %v23 = vld [vmem:[%s1] sm:$0xf]
    %v24 = vld [vmem:[%s1 + $0x4] sm:$0xf]
    %v25 = vld [vmem:[%s1 + $0x8] sm:$0xf]
    %v26 = vld [vmem:[%s1 + $0xc] sm:$0xf]
    %v27 = vld [vmem:[%s2] sm:$0x1]
    %v29 = vlaneseq
    %v30 = vshrl.u32 %v29, 7
    %v31 = vsub.s32 0, %v30
    %v32 = vrot.slane %v27, %v31
    %v38 = vunpack.c.l.b16 %v23
    %v39 = vunpack.c.l.b16 %v24
    %v40 = vunpack.c.l.b16 %v25
    %v41 = vunpack.c.l.b16 %v26
    %v42 = vpack.c.b16 %v39, %v38
    %v43 = vpack.c.b16 %v41, %v40
    %vm46 = vcmask 261120
    %v48 = vsel %vm46, %v22, 0
    %50 = vmatprep.subr.bf16.mxu0 0
    %51 = vmatpush1.bf16.msra.mxu0 %v42
    %52 = vmatprep.subr.bf16.mxu0 0
    %53 = vmatpush1.bf16.msra.mxu0 %v43
    %54 = vmatprep.subr.bf16.mxu0 0
    %55 = vmatpush1.bf16.msra.mxu0 0
    %56 = vmatprep.subr.bf16.mxu0 0
    %57 = vmatpush1.bf16.msra.mxu0 0
    %58 = vmatprep.subr.bf16.mxu0 0
    %59 = vmatpush1.bf16.msra.mxu0 0
    %60 = vmatprep.subr.bf16.mxu0 0
    %61 = vmatpush1.bf16.msra.mxu0 0
    %62 = vmatprep.subr.bf16.mxu0 0
    %63 = vmatpush1.bf16.msra.mxu0 0
    %64 = vmatprep.subr.bf16.mxu0 0
    %65 = vmatpush1.bf16.msra.mxu0 0
    %66 = vmatprep.subr.bf16.mxu0 0
    %67 = vmatpush1.bf16.msra.mxu0 0
    %68 = vmatprep.subr.bf16.mxu0 0
    %69 = vmatpush1.bf16.msra.mxu0 0
    %70 = vmatprep.subr.bf16.mxu0 0
    %71 = vmatpush1.bf16.msra.mxu0 0
    %72 = vmatprep.subr.bf16.mxu0 0
    %73 = vmatpush1.bf16.msra.mxu0 0
    %74 = vmatprep.subr.bf16.mxu0 0
    %75 = vmatpush1.bf16.msra.mxu0 0
    %76 = vmatprep.subr.bf16.mxu0 0
    %77 = vmatpush1.bf16.msra.mxu0 0
    %78 = vmatprep.subr.bf16.mxu0 0
    %79 = vmatpush1.bf16.msra.mxu0 0
    %80 = vmatprep.subr.bf16.mxu0 0
    %81 = vmatpush1.bf16.msra.mxu0 0
    %82 = vmatprep.mubr.bf16.mxu0 0
    %83 = vmatmul.mubr.bf16.gmra.mrb[0].mxu0 %v48
    %v84 = vpop.f32.mrb[0].mxu0
    %v85 = vadd.f32 %v32, %v84
    %v86 = vpop.f32.mrb[0].mxu0
    %v87 = vpop.f32.mrb[0].mxu0
    %v88 = vpop.f32.mrb[0].mxu0
    %89 = vdwg.mxu0
    %v90 = vmax.f32 %v85, 0.0
    %v91 = vpack.c.bf16 %v90, %v90
    %v92 = vld [vmem:[%s3] sm:$0xf]
    %v93 = vld [vmem:[%s3 + $0x4] sm:$0xf]
    %v94 = vld [vmem:[%s3 + $0x8] sm:$0xf]
    %v95 = vld [vmem:[%s3 + $0xc] sm:$0xf]
    %v96 = vld [vmem:[%s3 + $0x10] sm:$0xf]
    %v97 = vld [vmem:[%s3 + $0x14] sm:$0xf]
    %v98 = vld [vmem:[%s3 + $0x18] sm:$0xf]
    %v99 = vld [vmem:[%s3 + $0x1c] sm:$0xf]
    %v100 = vld [vmem:[%s4] sm:$0x1]
    %v102 = vlaneseq
    %v103 = vshrl.u32 %v102, 7
    %v104 = vsub.s32 0, %v103
    %v105 = vrot.slane %v100, %v104
    %v115 = vunpack.c.l.b16 %v92
    %v116 = vunpack.c.l.b16 %v93
    %v117 = vunpack.c.l.b16 %v94
    %v118 = vunpack.c.l.b16 %v95
    %v119 = vunpack.c.l.b16 %v96
    %v120 = vunpack.c.l.b16 %v97
    %v121 = vunpack.c.l.b16 %v98
    %v122 = vunpack.c.l.b16 %v99
    %v123 = vpack.c.b16 %v116, %v115
    %v124 = vpack.c.b16 %v118, %v117
    %v125 = vpack.c.b16 %v120, %v119
    %v126 = vpack.c.b16 %v122, %v121
    %vm131 = vcmask 523264
    %v133 = vsel %vm131, %v91, 0
    %135 = vmatprep.subr.bf16.mxu0 0
    %136 = vmatpush1.bf16.msra.mxu0 %v123
    %137 = vmatprep.subr.bf16.mxu0 0
    %138 = vmatpush1.bf16.msra.mxu0 %v124
    %139 = vmatprep.subr.bf16.mxu0 0
    %140 = vmatpush1.bf16.msra.mxu0 %v125
    %141 = vmatprep.subr.bf16.mxu0 0
    %142 = vmatpush1.bf16.msra.mxu0 %v126
    %143 = vmatprep.subr.bf16.mxu0 0
    %144 = vmatpush1.bf16.msra.mxu0 0
    %145 = vmatprep.subr.bf16.mxu0 0
    %146 = vmatpush1.bf16.msra.mxu0 0
    %147 = vmatprep.subr.bf16.mxu0 0
    %148 = vmatpush1.bf16.msra.mxu0 0
    %149 = vmatprep.subr.bf16.mxu0 0
    %150 = vmatpush1.bf16.msra.mxu0 0
    %151 = vmatprep.subr.bf16.mxu0 0
    %152 = vmatpush1.bf16.msra.mxu0 0
    %153 = vmatprep.subr.bf16.mxu0 0
    %154 = vmatpush1.bf16.msra.mxu0 0
    %155 = vmatprep.subr.bf16.mxu0 0
    %156 = vmatpush1.bf16.msra.mxu0 0
    %157 = vmatprep.subr.bf16.mxu0 0
    %158 = vmatpush1.bf16.msra.mxu0 0
    %159 = vmatprep.subr.bf16.mxu0 0
    %160 = vmatpush1.bf16.msra.mxu0 0
    %161 = vmatprep.subr.bf16.mxu0 0
    %162 = vmatpush1.bf16.msra.mxu0 0
    %163 = vmatprep.subr.bf16.mxu0 0
    %164 = vmatpush1.bf16.msra.mxu0 0
    %165 = vmatprep.subr.bf16.mxu0 0
    %166 = vmatpush1.bf16.msra.mxu0 0
    %167 = vmatprep.mubr.bf16.mxu0 0
    %168 = vmatmul.mubr.bf16.gmra.mrb[0].mxu0 %v133
    %v169 = vpop.f32.mrb[0].mxu0
    %v170 = vadd.f32 %v105, %v169
    %v171 = vpop.f32.mrb[0].mxu0
    %v172 = vpop.f32.mrb[0].mxu0
    %v173 = vpop.f32.mrb[0].mxu0
    %174 = vdwg.mxu0
    %175 = vmax.xlane.f32.xlu0 %v170
    %v176 = vpop.xlane.xlu0 %175
    %v177 = vsub.f32 %v170, %v176
    %v178 = vmul.f32 %v177, 1.442695
    %v179 = vpow.pop %v178
    %180 = vadd.xlane.f32.xlu0 %v179
    %v181 = vpop.xlane.xlu0 %180
    %v182 = vrcp.pop %v181
    %v183 = vmul.f32 %v179, %v182
    %184 = vst [vmem:[#allocation2] sm:$0xff] %v183
    // Predicated region
    $region22: #{policy_net_forward.1} parent=1 // pred_check
      _
    $region23: #{policy_net_forward.1} parent=1 // pred_check_branch
      %186 = sbr.rel (0) target = $region25
    $region24: #{policy_net_forward.1} parent=1 // pred_region
      %s188 = ssub.s32 128, 128
      %189 = vsyncadd [#allocation3], %s188
      %s191 = sshll.u32 [#allocation2], 4
      %s192 = int_to_ptr.vmem [resolvable:$true] %s191
      %194 = dma.vmem_to_hbm [thread:$0]  %s192, 128, %s5, [#allocation3]
    $region25: #{policy_net_forward.1} parent=1 // pred_fallthru
      _
    // Predicated region
    $region26: #{policy_net_forward.1} parent=1 // pred_check
      _
    $region27: #{policy_net_forward.1} parent=1 // pred_check_branch
      %196 = sbr.rel (0) target = $region29
    $region28: #{policy_net_forward.1} parent=1 // pred_region
      %197 = dma.done [#allocation3], 128
    $region29: #{policy_net_forward.1} parent=1 // pred_fallthru
      _
    %198 = vsyncpa [#allocation3], 1

</llo_original>
